<compile_context>
chip_gen: v7x
topology: tpu7x:2x2x1
jax: 0.10.0
libtpu: 0.0.40
codegen_flags: <defaults>
</compile_context>

<pallas_src>
import functools

import jax
import jax.numpy as jnp
from jax.experimental import pallas as pl
from jax.experimental.pallas import tpu as pltpu


# ------------------------------ Pallas kernel -------------------------------

def _swish_kernel(x_ref, o_ref, *, compute_dtype):
    x = x_ref[...].astype(compute_dtype)
    # sigmoid(x) = 0.5 * (tanh(x/2) + 1): one EUP op + VPU mul/add.
    sig = 0.5 * (jnp.tanh(x * 0.5) + 1.0)
    o_ref[...] = (x * sig).astype(o_ref.dtype)


# ------------------------- per-generation VMEM budget ------------------------

def _vmem_budget():
    """Returns (vmem_limit_bytes, per-buffer tile byte budget)."""
    try:
        vmem = pltpu.get_tpu_info().vmem_capacity_bytes
    except Exception:
        vmem = 64 * 1024 * 1024  # conservative (v7x-sized) fallback
    if vmem >= 128 * 1024 * 1024:                  # v5e / v6e
        return 64 * 1024 * 1024, 8 * 1024 * 1024
    return 40 * 1024 * 1024, 4 * 1024 * 1024       # v7x: 64 MiB VMEM per TC


# --------------------------------- wrapper ----------------------------------

def swish(x):
    """Elementwise swish: x * sigmoid(x). Accepts any shape / float dtype."""
    dtype = x.dtype
    assert jnp.issubdtype(dtype, jnp.floating), "swish expects a float input"
    total = x.size
    if total == 0:
        return x

    flat = x.reshape(-1)

    # Lane-dense 2D view: pick the widest lane count (multiple of 128) that
    # divides the element count -> no pad / slice at all on this fast path.
    lanes = None
    for cand in (512, 256, 128):
        if total % cand == 0:
            lanes = cand
            break
    padded_total = total
    if lanes is None:                      # ragged tail: pad < 128 elements
        lanes = 128
        padded_total = pl.cdiv(total, lanes) * lanes
        flat = jnp.pad(flat, (0, padded_total - total))

    rows = padded_total // lanes
    itemsize = jnp.dtype(dtype).itemsize

    # Row tile: sublane-packing aligned (8 f32 / 16 bf16 / 32 one-byte) and
    # sized to ~4-8 MiB per buffer depending on generation.  Pallas masks the
    # final partial row-block, so tm need not divide rows.
    vmem_limit, tile_budget = _vmem_budget()
    sub = max(8, 32 // itemsize)
    tm_cap = max(sub, (tile_budget // (lanes * itemsize)) // sub * sub)
    rows_aligned = pl.cdiv(rows, sub) * sub
    tm = min(tm_cap, rows_aligned)

    x2d = flat.reshape(rows, lanes)
    compute_dtype = dtype if dtype in (jnp.float32, jnp.bfloat16) else jnp.float32

    out2d = pl.pallas_call(
        functools.partial(_swish_kernel, compute_dtype=compute_dtype),
        out_shape=jax.ShapeDtypeStruct((rows, lanes), dtype),
        grid_spec=pltpu.PrefetchScalarGridSpec(
            num_scalar_prefetch=0,
            grid=(pl.cdiv(rows, tm),),
            in_specs=[pl.BlockSpec((tm, lanes), lambda i: (i, 0))],
            out_specs=pl.BlockSpec((tm, lanes), lambda i: (i, 0))),
        compiler_params=pltpu.CompilerParams(
            dimension_semantics=("parallel",),
            vmem_limit_bytes=vmem_limit),
    )(x2d)

    out_flat = out2d.reshape(-1)
    if padded_total != total:
        out_flat = out_flat[:total]
    return out_flat.reshape(x.shape)


# ----------------------------------- main ------------------------------------

if __name__ == "__main__":
    # Shape consistent with the module's typical NCHW activation input.
    key = jax.random.PRNGKey(0)
    x = jax.random.normal(key, (2, 4, 16, 16), jnp.float32)

    fwd = jax.jit(swish)
    out = jax.block_until_ready(fwd(x))

    ref = x * jax.nn.sigmoid(x)
    assert out.shape == x.shape and out.dtype == x.dtype
    assert jnp.allclose(out, ref, atol=1e-5, rtol=1e-5), (
        float(jnp.max(jnp.abs(out - ref))))

    # Odd-shaped bf16 input: exercises the ragged (pad-tail) path, 16-sublane
    # alignment, and native-bf16 in-kernel compute.
    y = jax.random.normal(jax.random.PRNGKey(0), (3, 5, 17, 19), jnp.bfloat16)
    out2 = jax.block_until_ready(jax.jit(swish)(y))
    yf = y.astype(jnp.float32)
    ref2 = yf * jax.nn.sigmoid(yf)
    assert out2.shape == y.shape and out2.dtype == y.dtype
    assert jnp.allclose(out2.astype(jnp.float32), ref2, atol=2e-2, rtol=2e-2), (
        float(jnp.max(jnp.abs(out2.astype(jnp.float32) - ref2))))

    print("KERNEL_OK")
</pallas_src>

<mosaic_0001>
module attributes {stable_mosaic.version = 11 : i64} {
  func.func @_swish_kernel(%arg0: i32, %arg1: memref<8x512xf32, #tpu.memory_space<vmem>>, %arg2: memref<8x512xf32, #tpu.memory_space<vmem>>) attributes {dimension_semantics = [#tpu.dimension_semantics<parallel>], iteration_bounds = array<i64: 1>, scalar_prefetch = 0 : i64, scratch_operands = 0 : i64, tpu.core_type = #tpu.core_type<tc>, window_params = [{transform_indices = @transform_0, window_bounds = array<i64: 8, 512>}, {transform_indices = @transform_1, window_bounds = array<i64: 8, 512>}]} {
    %c0 = arith.constant 0 : index
    %c0_0 = arith.constant 0 : index
    %0 = vector.load %arg1[%c0, %c0_0] : memref<8x512xf32, #tpu.memory_space<vmem>>, vector<8x512xf32>
    %cst = arith.constant 5.000000e-01 : f32
    %1 = vector.broadcast %cst : f32 to vector<8x512xf32>
    %2 = arith.mulf %0, %1 : vector<8x512xf32>
    %3 = math.tanh %2 : vector<8x512xf32>
    %cst_1 = arith.constant 1.000000e+00 : f32
    %4 = vector.broadcast %cst_1 : f32 to vector<8x512xf32>
    %5 = arith.addf %3, %4 : vector<8x512xf32>
    %cst_2 = arith.constant 5.000000e-01 : f32
    %6 = vector.broadcast %cst_2 : f32 to vector<8x512xf32>
    %7 = arith.mulf %6, %5 : vector<8x512xf32>
    %8 = arith.mulf %0, %7 : vector<8x512xf32>
    %c0_3 = arith.constant 0 : index
    %c0_4 = arith.constant 0 : index
    %9 = vector.load %arg2[%c0_3, %c0_4] : memref<8x512xf32, #tpu.memory_space<vmem>>, vector<8x512xf32>
    tpu.vector_store %arg2[%c0_3, %c0_4], %8 {strides = array<i32>} : memref<8x512xf32, #tpu.memory_space<vmem>>, vector<8x512xf32>,
    return
  }
  func.func @transform_0(%arg0: i32) -> (i32, i32) {
    %c0_i32 = arith.constant 0 : i32
    %c0_i32_0 = arith.constant 0 : i32
    return %arg0, %c0_i32 : i32, i32
  }
  func.func @transform_1(%arg0: i32) -> (i32, i32) {
    %c0_i32 = arith.constant 0 : i32
    %c0_i32_0 = arith.constant 0 : i32
    return %arg0, %c0_i32 : i32, i32
  }
}

</mosaic_0001>

<llo_original>
// kernel: swish.1
$region0: #{swish.1}
  #allocation0 [shape = 'u32[]', space=smem, size = 0x4, offset = 0x4, fixed_abs, tag = 'smem constant byte address 0x4 - core index']
  #allocation1 [shape = 'u32[144,128]{1,0:T(1,128)}', space=vmem, size = 0x12000, scoped, tag = 'internal scratch']
  %s0 = inlined_call_operand.vmem [shape: f32[4,512], index: 0, kind: input, shape index: {}]
  %s1 = inlined_call_operand.vmem [shape: f32[4,512], index: 1, kind: output, shape index: {}]
  %s2 = sld [smem:[#allocation0]]
  $region33: #{swish.1} parent=0
    _
  %s4 = ssub.s32 1, %s2
  %s5 = scalar_select 0, %s4, %s2
  $region1: #{swish.1} parent=0
    #allocation2 [shape = 'u8[16384]{0}', space=vmem, size = 0x4000, scoped, tag = 'output window, operand 0, single buffered']
    // Predicated region
    $region2: #{swish.1} parent=1 // pred_check
      _
    $region3: #{swish.1} parent=1 // pred_check_branch
      %7 = sbr.rel (0) target = $region5
    $region4: #{swish.1} parent=1 // pred_region
      _
    $region5: #{swish.1} parent=1 // pred_fallthru
      _
    %v8 = vld [vmem:[%s0] sm:$0xff]
    %v9 = vld [vmem:[%s0 + $0x8] sm:$0xff]
    %v10 = vld [vmem:[%s0 + $0x10] sm:$0xff]
    %v11 = vld [vmem:[%s0 + $0x18] sm:$0xff]
    %v12 = vmul.f32 %v8, 0.5
    %v13 = vmul.f32 %v9, 0.5
    %v14 = vmul.f32 %v10, 0.5
    %v15 = vmul.f32 %v11, 0.5
    %v16 = vtanh.pop %v12
    %v17 = vtanh.pop %v13
    %v18 = vtanh.pop %v14
    %v19 = vtanh.pop %v15
    %v20 = vadd.f32 %v16, 1.0
    %v21 = vadd.f32 %v17, 1.0
    %v22 = vadd.f32 %v18, 1.0
    %v23 = vadd.f32 %v19, 1.0
    %v24 = vmul.f32 %v20, 0.5
    %v25 = vmul.f32 %v21, 0.5
    %v26 = vmul.f32 %v22, 0.5
    %v27 = vmul.f32 %v23, 0.5
    %v28 = vmul.f32 %v8, %v24
    %v29 = vmul.f32 %v9, %v25
    %v30 = vmul.f32 %v10, %v26
    %v31 = vmul.f32 %v11, %v27
    %32 = vst [vmem:[#allocation2] sm:$0xff] %v28
    %33 = vst [vmem:[#allocation2 + $0x8] sm:$0xff] %v29
    %34 = vst [vmem:[#allocation2 + $0x10] sm:$0xff] %v30
    %35 = vst [vmem:[#allocation2 + $0x18] sm:$0xff] %v31
    // Predicated region
    $region6: #{swish.1} parent=1 // pred_check
      _
    $region7: #{swish.1} parent=1 // pred_check_branch
      %37 = sbr.rel (0) target = $region9
    $region8: #{swish.1} parent=1 // pred_region
      // Predicated region
      $region10: #{swish.1} parent=8 // pred_check
        _
      $region11: #{swish.1} parent=8 // pred_check_branch
        %39 = sbr.rel (0) target = $region13
      $region12: #{swish.1} parent=8 // pred_region
        // Predicated region
        $region14: #{swish.1} parent=12 // pred_check
          _
        $region15: #{swish.1} parent=12 // pred_check_branch
          %41 = sbr.rel (0) target = $region17
        $region16: #{swish.1} parent=12 // pred_region
          loop: start=0, step=1, limit=1
          $region18: #{swish.1} parent=16 // loop_pre_header
            _
          $region19: #{swish.1} parent=16 // loop_header
            %s43 = sphi 0, %s47
            %p44 = scmp.ge.s32.totalorder %s43, 1
            %s48 = sphi [#allocation2], [#allocation2]
            %s49 = sphi %s1, %s1
          $region20: #{swish.1} parent=16 // loop_header_branch
            %46 = sbr.rel (%p44) target = $region24
          $region21: #{swish.1} parent=16 // loop_body
            %v50 = vld [vmem:[%s48] sm:$0xff]
            %51 = vst [vmem:[%s49] sm:$0xff] %v50
            %v52 = vld [vmem:[%s48 + $0x8] sm:$0xff]
            %53 = vst [vmem:[%s49 + $0x8] sm:$0xff] %v52
          $region22: #{swish.1} parent=16 // loop_footer
            %s47 = sadd.s32 1, %s43
          $region23: #{swish.1} parent=16 // loop_footer_branch
            %42 = sbr.rel target = $region19
          $region24: #{swish.1} parent=16 // loop_exit
            _
        $region17: #{swish.1} parent=12 // pred_fallthru
          _
        // Predicated region
        $region25: #{swish.1} parent=12 // pred_check
          _
        $region26: #{swish.1} parent=12 // pred_check_branch
          %55 = sbr.rel target = $region28
        $region27: #{swish.1} parent=12 // pred_region
          _
        $region28: #{swish.1} parent=12 // pred_fallthru
          _
      $region13: #{swish.1} parent=8 // pred_fallthru
        _
      %56 = vnop
    $region9: #{swish.1} parent=1 // pred_fallthru
      _
    // Predicated region
    $region29: #{swish.1} parent=1 // pred_check
      _
    $region30: #{swish.1} parent=1 // pred_check_branch
      %58 = sbr.rel (0) target = $region32
    $region31: #{swish.1} parent=1 // pred_region
      _
    $region32: #{swish.1} parent=1 // pred_fallthru
      _

</llo_original>
